<compile_context>
chip_gen: v7x
topology: tpu7x:2x2x1
jax: 0.10.0
libtpu: 0.0.40
codegen_flags: <defaults>
</compile_context>

<pallas_src>
import functools

import jax
import jax.numpy as jnp
from jax.experimental import pallas as pl
from jax.experimental.pallas import tpu as pltpu

ALPHA = 0.05
LANES = 128
MAX_TILE_ROWS = 2048   # (2048, 128) f32 block = 1 MiB


def _round_up(x, m):
    return (x + m - 1) // m * m


def _ceil_div(x, m):
    return -(-x // m)


def _sublane_multiple(dtype):
    # Minimum second-minor tiling: f32 -> 8, bf16 -> 16, 8-bit -> 32.
    bits = jnp.dtype(dtype).itemsize * 8
    return max(8, 256 // bits)


def _num_parallel_cores():
    """TensorCores a 'parallel' leading grid axis can shard across."""
    try:
        kind = jax.devices()[0].device_kind.lower()
    except Exception:
        return 1
    if "v7" in kind or "v4" in kind:
        return 2
    # v5p (megacore) reports without 'lite'/'e'; v5e reports 'v5 lite'/'v5e'.
    if "v5" in kind and "lite" not in kind and "v5e" not in kind:
        return 2
    return 1  # v5e / v6e (single TensorCore) and anything unknown


def _blur_loss(x, z, inv_alpha):
    """Elementwise yolov5 BCE-blur loss term, f32 math."""
    x = x.astype(jnp.float32)   # logits
    z = z.astype(jnp.float32)   # targets
    # Stable BCE-with-logits, sharing e = exp(-|x|) with the sigmoid:
    #   bce        = max(x, 0) - x*z + log1p(exp(-|x|))
    #   sigmoid(x) = where(x >= 0, 1/(1+e), e/(1+e))
    e = jnp.exp(-jnp.abs(x))
    bce = jnp.maximum(x, 0.0) - x * z + jnp.log1p(e)
    r = 1.0 / (1.0 + e)
    p = jnp.where(x >= 0.0, r, e * r)
    alpha_factor = 1.0 - jnp.exp((p - z - 1.0) * inv_alpha)
    return bce * alpha_factor


def _bce_blur_kernel(pred_ref, true_ref, out_ref, acc_ref, *,
                     inv_alpha, tile_rows, tiles_per_core,
                     last_block, tail_valid, has_tail_mask, has_overflow):
    c = pl.program_id(0)   # core / partial-sum slot ("parallel")
    j = pl.program_id(1)   # streaming reduction axis ("arbitrary")
    block = c * tiles_per_core + j

    @pl.when(j == 0)
    def _():
        acc_ref[...] = jnp.zeros_like(acc_ref)

    # ---- steady state: full tiles, no masking, pure VALU add into VMEM acc.
    if has_tail_mask or has_overflow:
        full_cond = (block < last_block) if has_tail_mask else (block <= last_block)

        @pl.when(full_cond)
        def _():
            acc_ref[...] += _blur_loss(pred_ref[...], true_ref[...], inv_alpha)
    else:
        acc_ref[...] += _blur_loss(pred_ref[...], true_ref[...], inv_alpha)

    # ---- tail block only: mask padded / DMA-clipped elements (block-local
    #      flat index, so no int32 global-index overflow).
    if has_tail_mask:
        @pl.when(block == last_block)
        def _():
            loss = _blur_loss(pred_ref[...], true_ref[...], inv_alpha)
            rid = jax.lax.broadcasted_iota(jnp.int32, (tile_rows, LANES), 0)
            cid = jax.lax.broadcasted_iota(jnp.int32, (tile_rows, LANES), 1)
            local = rid * LANES + cid
            acc_ref[...] += jnp.where(local < tail_valid, loss, 0.0)

    # ---- epilogue: one full reduce per core, lane-dense (8,128) output block.
    @pl.when(j == pl.num_programs(1) - 1)
    def _():
        core_sum = jnp.sum(acc_ref[...])
        out_ref[...] = jnp.full((8, LANES), core_sum, dtype=jnp.float32)


def bce_blur_with_logits_loss(pred, true, alpha=ALPHA):
    """pred, true: equal arbitrary shapes (any element count); returns scalar mean."""
    assert pred.shape == true.shape
    total_n = int(pred.size)
    inv_alpha = 1.0 / (alpha + 1e-4)

    sub = max(_sublane_multiple(pred.dtype), _sublane_multiple(true.dtype))
    rows = _ceil_div(total_n, LANES)
    rows_p = _round_up(max(rows, 1), sub)          # minimal sublane rounding only
    padded_n = rows_p * LANES

    tile_rows = min(MAX_TILE_ROWS, rows_p)         # multiple of `sub` by construction
    tiles_real = _ceil_div(rows_p, tile_rows)

    num_cores = min(_num_parallel_cores(), tiles_real)
    tiles_per_core = _ceil_div(tiles_real, num_cores)
    tiles_total = tiles_per_core * num_cores
    has_overflow = tiles_total > tiles_real        # fully-empty trailing steps exist

    last_block = tiles_real - 1
    tail_valid = total_n - last_block * tile_rows * LANES   # valid elems in last block
    has_tail_mask = tail_valid < tile_rows * LANES

    needs_pad = padded_n != total_n
    if needs_pad:
        # Minimal pad (< sub*128 elems); allow_input_fusion lets XLA fuse it into
        # the pallas_call operand read instead of materializing an HBM copy.
        pad = padded_n - total_n
        pred2d = jnp.pad(pred.reshape(-1), (0, pad)).reshape(rows_p, LANES)
        true2d = jnp.pad(true.reshape(-1), (0, pad)).reshape(rows_p, LANES)
    else:
        # Fast path: pure reshape, no copy.
        pred2d = pred.reshape(rows_p, LANES)
        true2d = true.reshape(rows_p, LANES)

    if has_overflow:
        # Clamp so overflow steps re-target the last real block (DMA dedup'd;
        # the kernel skips accumulation for those steps).
        def in_map(c, j):
            return (jnp.minimum(c * tiles_per_core + j, last_block), 0)
    else:
        def in_map(c, j):
            return (c * tiles_per_core + j, 0)

    kernel = functools.partial(
        _bce_blur_kernel,
        inv_alpha=inv_alpha, tile_rows=tile_rows, tiles_per_core=tiles_per_core,
        last_block=last_block, tail_valid=tail_valid,
        has_tail_mask=has_tail_mask, has_overflow=has_overflow)

    compiler_params = pltpu.CompilerParams(
        dimension_semantics=("parallel", "arbitrary"),
        allow_input_fusion=(True, True) if needs_pad else None,
    )

    out = pl.pallas_call(
        kernel,
        out_shape=jax.ShapeDtypeStruct((num_cores * 8, LANES), jnp.float32),
        grid_spec=pltpu.PrefetchScalarGridSpec(
            num_scalar_prefetch=0,
            grid=(num_cores, tiles_per_core),
            in_specs=[
                pl.BlockSpec((tile_rows, LANES), in_map),
                pl.BlockSpec((tile_rows, LANES), in_map),
            ],
            out_specs=pl.BlockSpec((8, LANES), lambda c, j: (c, 0)),
            scratch_shapes=[pltpu.VMEM((tile_rows, LANES), jnp.float32)],
        ),
        compiler_params=compiler_params,
    )(pred2d, true2d)

    # Row 8*c (all lanes equal) holds core c's partial sum.
    per_core = out[::8, 0]
    return jnp.sum(per_core) / jnp.float32(total_n)


def _reference(pred, true, alpha=ALPHA):
    # Pure-JAX reference mirroring the PyTorch module.
    x = pred.astype(jnp.float32)
    z = true.astype(jnp.float32)
    bce = jnp.maximum(x, 0.0) - x * z + jnp.log1p(jnp.exp(-jnp.abs(x)))
    p = jax.nn.sigmoid(x)
    dx = p - z
    af = 1.0 - jnp.exp((dx - 1.0) / (alpha + 1e-4))
    return jnp.mean(bce * af)


if __name__ == "__main__":
    key = jax.random.PRNGKey(0)

    # Main check: detector-head-like activation map (N, C, H, W), fast path
    # (element count is a multiple of 8*128 -> no pad, reshape only).
    k1, k2 = jax.random.split(key)
    shape = (2, 4, 16, 16)
    pred = jax.random.normal(k1, shape, dtype=jnp.float32)
    true = (jax.random.uniform(k2, shape, dtype=jnp.float32) > 0.5).astype(
        jnp.float32)
    out = jax.block_until_ready(bce_blur_with_logits_loss(pred, true))
    ref = _reference(pred, true)
    assert jnp.allclose(out, ref, atol=1e-5, rtol=1e-5), (out, ref)

    # Secondary check: ragged element count (exercises minimal pad + guarded
    # tail-mask path).
    k3, k4 = jax.random.split(k1)
    shape2 = (3, 5, 7, 9)
    pred2 = jax.random.normal(k3, shape2, dtype=jnp.float32)
    true2 = (jax.random.uniform(k4, shape2, dtype=jnp.float32) > 0.5).astype(
        jnp.float32)
    out2 = jax.block_until_ready(bce_blur_with_logits_loss(pred2, true2))
    ref2 = _reference(pred2, true2)
    assert jnp.allclose(out2, ref2, atol=1e-5, rtol=1e-5), (out2, ref2)

    print("KERNEL_OK")
</pallas_src>

<mosaic_0001>
module attributes {stable_mosaic.version = 11 : i64} {
  func.func @_bce_blur_kernel(%arg0: i32, %arg1: i32, %arg2: memref<16x128xf32, #tpu.memory_space<vmem>>, %arg3: memref<16x128xf32, #tpu.memory_space<vmem>>, %arg4: memref<8x128xf32, #tpu.memory_space<vmem>>, %arg5: memref<16x128xf32, #tpu.memory_space<vmem>>) attributes {dimension_semantics = [#tpu.dimension_semantics<parallel>, #tpu.dimension_semantics<arbitrary>], iteration_bounds = array<i64: 1, 1>, scalar_prefetch = 0 : i64, scratch_operands = 1 : i64, tpu.core_type = #tpu.core_type<tc>, window_params = [{transform_indices = @transform_0, window_bounds = array<i64: 16, 128>}, {transform_indices = @transform_1, window_bounds = array<i64: 16, 128>}, {transform_indices = @transform_2, window_bounds = array<i64: 8, 128>}]} {
    %c0_i32 = arith.constant 0 : i32
    %0 = arith.cmpi eq, %arg1, %c0_i32 : i32
    %1 = arith.extui %0 : i1 to i32
    %c0_i32_0 = arith.constant 0 : i32
    %2 = arith.cmpi ne, %1, %c0_i32_0 : i32
    scf.if %2 {
      %cst_17 = arith.constant 0.000000e+00 : f32
      %38 = vector.broadcast %cst_17 : f32 to vector<16x128xf32>
      %c0_18 = arith.constant 0 : index
      %c0_19 = arith.constant 0 : index
      %39 = vector.load %arg5[%c0_18, %c0_19] : memref<16x128xf32, #tpu.memory_space<vmem>>, vector<16x128xf32>
      tpu.vector_store %arg5[%c0_18, %c0_19], %38 {strides = array<i32>} : memref<16x128xf32, #tpu.memory_space<vmem>>, vector<16x128xf32>,
    } else {
    }
    %c0 = arith.constant 0 : index
    %c0_1 = arith.constant 0 : index
    %3 = vector.load %arg5[%c0, %c0_1] : memref<16x128xf32, #tpu.memory_space<vmem>>, vector<16x128xf32>
    %c0_2 = arith.constant 0 : index
    %c0_3 = arith.constant 0 : index
    %4 = vector.load %arg2[%c0_2, %c0_3] : memref<16x128xf32, #tpu.memory_space<vmem>>, vector<16x128xf32>
    %c0_4 = arith.constant 0 : index
    %c0_5 = arith.constant 0 : index
    %5 = vector.load %arg3[%c0_4, %c0_5] : memref<16x128xf32, #tpu.memory_space<vmem>>, vector<16x128xf32>
    %6 = math.absf %4 : vector<16x128xf32>
    %cst = arith.constant 0.000000e+00 : f32
    %7 = vector.broadcast %cst : f32 to vector<16x128xf32>
    %8 = arith.subf %7, %6 : vector<16x128xf32>
    %9 = math.exp %8 : vector<16x128xf32>
    %cst_6 = arith.constant 0.000000e+00 : f32
    %10 = vector.broadcast %cst_6 : f32 to vector<16x128xf32>
    %11 = arith.maximumf %4, %10 : vector<16x128xf32>
    %12 = arith.mulf %4, %5 : vector<16x128xf32>
    %13 = arith.subf %11, %12 : vector<16x128xf32>
    %14 = math.log1p %9 : vector<16x128xf32>
    %15 = arith.addf %13, %14 : vector<16x128xf32>
    %cst_7 = arith.constant 1.000000e+00 : f32
    %16 = vector.broadcast %cst_7 : f32 to vector<16x128xf32>
    %17 = arith.addf %16, %9 : vector<16x128xf32>
    %cst_8 = arith.constant 1.000000e+00 : f32
    %18 = vector.broadcast %cst_8 : f32 to vector<16x128xf32>
    %19 = arith.divf %18, %17 : vector<16x128xf32>
    %cst_9 = arith.constant 0.000000e+00 : f32
    %20 = vector.broadcast %cst_9 : f32 to vector<16x128xf32>
    %21 = arith.cmpf oge, %4, %20 : vector<16x128xf32>
    %22 = arith.mulf %9, %19 : vector<16x128xf32>
    %23 = arith.select %21, %19, %22 : vector<16x128xi1>, vector<16x128xf32>
    %24 = arith.subf %23, %5 : vector<16x128xf32>
    %cst_10 = arith.constant 1.000000e+00 : f32
    %25 = vector.broadcast %cst_10 : f32 to vector<16x128xf32>
    %26 = arith.subf %24, %25 : vector<16x128xf32>
    %cst_11 = arith.constant 19.9600792 : f32
    %27 = vector.broadcast %cst_11 : f32 to vector<16x128xf32>
    %28 = arith.mulf %26, %27 : vector<16x128xf32>
    %29 = math.exp %28 : vector<16x128xf32>
    %cst_12 = arith.constant 1.000000e+00 : f32
    %30 = vector.broadcast %cst_12 : f32 to vector<16x128xf32>
    %31 = arith.subf %30, %29 : vector<16x128xf32>
    %32 = arith.mulf %15, %31 : vector<16x128xf32>
    %33 = arith.addf %3, %32 : vector<16x128xf32>
    %c0_13 = arith.constant 0 : index
    %c0_14 = arith.constant 0 : index
    %34 = vector.load %arg5[%c0_13, %c0_14] : memref<16x128xf32, #tpu.memory_space<vmem>>, vector<16x128xf32>
    tpu.vector_store %arg5[%c0_13, %c0_14], %33 {strides = array<i32>} : memref<16x128xf32, #tpu.memory_space<vmem>>, vector<16x128xf32>,
    %c0_i32_15 = arith.constant 0 : i32
    %35 = arith.cmpi eq, %arg1, %c0_i32_15 : i32
    %36 = arith.extui %35 : i1 to i32
    %c0_i32_16 = arith.constant 0 : i32
    %37 = arith.cmpi ne, %36, %c0_i32_16 : i32
    scf.if %37 {
      %c0_17 = arith.constant 0 : index
      %c0_18 = arith.constant 0 : index
      %38 = vector.load %arg5[%c0_17, %c0_18] : memref<16x128xf32, #tpu.memory_space<vmem>>, vector<16x128xf32>
      %39 = vector.shape_cast %38 : vector<16x128xf32> to vector<1x16x128xf32>
      %cst_19 = arith.constant dense<0.000000e+00> : vector<1xf32>
      %40 = vector.multi_reduction <add>, %39, %cst_19 [1, 2] : vector<1x16x128xf32> to vector<1xf32>
      %41 = vector.shape_cast %40 : vector<1xf32> to vector<1x1x1xf32>
      %42 = vector.extract %41[0, 0, 0] : f32 from vector<1x1x1xf32>
      %43 = vector.broadcast %42 : f32 to vector<8x128xf32>
      %c0_20 = arith.constant 0 : index
      %c0_21 = arith.constant 0 : index
      %44 = vector.load %arg4[%c0_20, %c0_21] : memref<8x128xf32, #tpu.memory_space<vmem>>, vector<8x128xf32>
      tpu.vector_store %arg4[%c0_20, %c0_21], %43 {strides = array<i32>} : memref<8x128xf32, #tpu.memory_space<vmem>>, vector<8x128xf32>,
    } else {
    }
    return
  }
  func.func @transform_0(%arg0: i32, %arg1: i32) -> (i32, i32) {
    %c1_i32 = arith.constant 1 : i32
    %0 = arith.muli %arg0, %c1_i32 : i32
    %1 = arith.addi %0, %arg1 : i32
    %c0_i32 = arith.constant 0 : i32
    %c0_i32_0 = arith.constant 0 : i32
    return %1, %c0_i32 : i32, i32
  }
  func.func @transform_1(%arg0: i32, %arg1: i32) -> (i32, i32) {
    %c1_i32 = arith.constant 1 : i32
    %0 = arith.muli %arg0, %c1_i32 : i32
    %1 = arith.addi %0, %arg1 : i32
    %c0_i32 = arith.constant 0 : i32
    %c0_i32_0 = arith.constant 0 : i32
    return %1, %c0_i32 : i32, i32
  }
  func.func @transform_2(%arg0: i32, %arg1: i32) -> (i32, i32) {
    %c0_i32 = arith.constant 0 : i32
    %c0_i32_0 = arith.constant 0 : i32
    return %arg0, %c0_i32 : i32, i32
  }
}

</mosaic_0001>

<llo_original>
// kernel: tpu_custom_call.1
$region0: #{tpu_custom_call.1}
  #allocation0 [shape = 'u32[]', space=smem, size = 0x4, offset = 0x4, fixed_abs, tag = 'smem constant byte address 0x4 - core index']
  #allocation1 [shape = 'u32[144,128]{1,0:T(1,128)}', space=vmem, size = 0x12000, scoped, tag = 'internal scratch']
  #allocation2 [shape = 'f32[16,128]{1,0:T(8,128)}', space=vmem, size = 0x2000, scoped, tag = 'scratch operand']
  %s0 = inlined_call_operand.hbm [shape: f32[16,128], index: 0, kind: input, shape index: {}]
  %s1 = inlined_call_operand.hbm [shape: f32[16,128], index: 1, kind: input, shape index: {}]
  %s2 = inlined_call_operand.hbm [shape: f32[8,128], index: 2, kind: output, shape index: {}]
  %s3 = sld [smem:[#allocation0]]
  $region34: #{tpu_custom_call.1} parent=0
    _
  %s5 = ssub.s32 1, %s3
  %s6 = scalar_select 0, %s5, %s3
  $region1: #{tpu_custom_call.1} parent=0
    #allocation3 [shape = 'u8[8192]{0}', space=vmem, size = 0x2000, scoped, tag = 'input window, operand 0, single buffered']
    #allocation4 [shape = 's32[1]{0}', space=sflag, size = 0x4, scoped, tag = 'scoped memory for tpu_custom_call.1']
    #allocation5 [shape = 's32[1]{0}', space=sflag, size = 0x4, scoped, tag = 'scoped memory for tpu_custom_call.1']
    #allocation6 [shape = 'u8[8192]{0}', space=vmem, size = 0x2000, scoped, tag = 'input window, operand 1, single buffered']
    #allocation7 [shape = 's32[1]{0}', space=sflag, size = 0x4, scoped, tag = 'scoped memory for tpu_custom_call.1']
    #allocation8 [shape = 'u8[4096]{0}', space=vmem, size = 0x1000, scoped, tag = 'output window, operand 0, single buffered']
    %7 = vsyncpa [#allocation4], 0
    %8 = vsyncpa [#allocation7], 0
    %9 = vsyncpa [#allocation5], 0
    // Predicated region
    $region2: #{tpu_custom_call.1} parent=1 // pred_check
      _
    $region3: #{tpu_custom_call.1} parent=1 // pred_check_branch
      %11 = sbr.rel (0) target = $region5
    $region4: #{tpu_custom_call.1} parent=1 // pred_region
      %s12 = sadd.s32 0, 0
      %s13 = smul.u32 2, %s12
      %s15 = ssub.s32 256, 256
      %16 = vsyncadd [#allocation4], %s15
      %s17 = smul.addr %s13, 128
      %s18 = scalar_lea.hbm %s0, %s17
      %s19 = sshll.u32 [#allocation3], 4
      %s20 = int_to_ptr.vmem [resolvable:$true] %s19
      %25 = dma.hbm_to_vmem [thread:$0]  %s18, 256, %s20, [#allocation4], 128, 128, 8
    $region5: #{tpu_custom_call.1} parent=1 // pred_fallthru
      _
    // Predicated region
    $region6: #{tpu_custom_call.1} parent=1 // pred_check
      _
    $region7: #{tpu_custom_call.1} parent=1 // pred_check_branch
      %27 = sbr.rel (0) target = $region9
    $region8: #{tpu_custom_call.1} parent=1 // pred_region
      %s28 = sadd.s32 0, 0
      %s29 = smul.u32 2, %s28
      %s31 = ssub.s32 256, 256
      %32 = vsyncadd [#allocation7], %s31
      %s33 = smul.addr %s29, 128
      %s34 = scalar_lea.hbm %s1, %s33
      %s35 = sshll.u32 [#allocation6], 4
      %s36 = int_to_ptr.vmem [resolvable:$true] %s35
      %41 = dma.hbm_to_vmem [thread:$0]  %s34, 256, %s36, [#allocation7], 128, 128, 8
    $region9: #{tpu_custom_call.1} parent=1 // pred_fallthru
      _
    // Predicated region
    $region10: #{tpu_custom_call.1} parent=1 // pred_check
      _
    $region11: #{tpu_custom_call.1} parent=1 // pred_check_branch
      %43 = sbr.rel (0) target = $region13
    $region12: #{tpu_custom_call.1} parent=1 // pred_region
      %44 = dma.done [#allocation4], 256
    $region13: #{tpu_custom_call.1} parent=1 // pred_fallthru
      _
    // Predicated region
    $region14: #{tpu_custom_call.1} parent=1 // pred_check
      _
    $region15: #{tpu_custom_call.1} parent=1 // pred_check_branch
      %46 = sbr.rel (0) target = $region17
    $region16: #{tpu_custom_call.1} parent=1 // pred_region
      %47 = dma.done [#allocation7], 256
    $region17: #{tpu_custom_call.1} parent=1 // pred_fallthru
      _
    %s48 = sadd.s32 0, 0
    %s49 = smul.u32 2, %s48
    %s50 = sadd.s32 0, 0
    %s51 = smul.u32 2, %s50
    %p52 = scmp.eq.s32.totalorder 0, 0
    // Predicated region
    $region18: #{tpu_custom_call.1} parent=1 // pred_check
      %p53 = pneg %p52
    $region19: #{tpu_custom_call.1} parent=1 // pred_check_branch
      %55 = sbr.rel (%p53) target = $region21
    $region20: #{tpu_custom_call.1} parent=1 // pred_region
      %56 = vst [vmem:[#allocation2] sm:$0xff] 0.0
      %57 = vst [vmem:[#allocation2 + $0x8] sm:$0xff] 0.0
    $region21: #{tpu_custom_call.1} parent=1 // pred_fallthru
      _
    %v58 = vld [vmem:[#allocation2] sm:$0xff]
    %v59 = vld [vmem:[#allocation2 + $0x8] sm:$0xff]
    %v60 = vld [vmem:[#allocation3] sm:$0xff]
    %v61 = vld [vmem:[#allocation3 + $0x8] sm:$0xff]
    %v62 = vld [vmem:[#allocation6] sm:$0xff]
    %v63 = vld [vmem:[#allocation6 + $0x8] sm:$0xff]
    %v64 = vand.u32 2147483647, %v60
    %v65 = vand.u32 2147483647, %v61
    %v66 = vsub.f32 0.0, %v64
    %v67 = vsub.f32 0.0, %v65
    %v68 = vmul.f32 %v66, 1.442695
    %v69 = vpow.pop %v68
    %v70 = vmul.f32 %v67, 1.442695
    %v71 = vpow.pop %v70
    %v72 = vmax.f32 %v60, 0.0
    %v73 = vmax.f32 %v61, 0.0
    %v74 = vmul.f32 %v60, %v62
    %v75 = vmul.f32 %v61, %v63
    %v76 = vsub.f32 %v72, %v74
    %v77 = vsub.f32 %v73, %v75
    %v78 = vadd.f32 %v69, 1.0
    %v79 = vlog2.pop %v78
    %v80 = vmul.f32 %v79, 0.6931472
    %v81 = vmul.f32 -0.5, %v69
    %v82 = vadd.f32 %v81, 1.0
    %v83 = vmul.f32 %v82, %v69
    %v84 = vand.u32 2147483647, %v69
    %vm85 = vcmp.lt.f32.partialorder %v84, 0.0004427343
    %v86 = vsel %vm85, %v83, %v80
    %v87 = vadd.f32 %v71, 1.0
    %v88 = vlog2.pop %v87
    %v89 = vmul.f32 %v88, 0.6931472
    %v90 = vmul.f32 -0.5, %v71
    %v91 = vadd.f32 %v90, 1.0
    %v92 = vmul.f32 %v91, %v71
    %v93 = vand.u32 2147483647, %v71
    %vm94 = vcmp.lt.f32.partialorder %v93, 0.0004427343
    %v95 = vsel %vm94, %v92, %v89
    %v96 = vadd.f32 %v76, %v86
    %v97 = vadd.f32 %v77, %v95
    %v98 = vadd.f32 %v69, 1.0
    %v99 = vadd.f32 %v71, 1.0
    %v100 = vrcp.pop %v98
    %v101 = vmul.f32 1.0, %v100
    %v102 = vrcp.pop %v99
    %v103 = vmul.f32 1.0, %v102
    %vm104 = vcmp.ge.f32.partialorder %v60, 0.0
    %vm105 = vcmp.ge.f32.partialorder %v61, 0.0
    %v106 = vmul.f32 %v69, %v101
    %v107 = vmul.f32 %v71, %v103
    %v108 = vsel %vm104, %v101, %v106
    %v109 = vsel %vm105, %v103, %v107
    %v110 = vsub.f32 %v108, %v62
    %v111 = vsub.f32 %v109, %v63
    %v112 = vsub.f32 %v110, 1.0
    %v113 = vsub.f32 %v111, 1.0
    %v114 = vmul.f32 %v112, 19.96008
    %v115 = vmul.f32 %v113, 19.96008
    %v116 = vmul.f32 %v114, 1.442695
    %v117 = vpow.pop %v116
    %v118 = vmul.f32 %v115, 1.442695
    %v119 = vpow.pop %v118
    %v120 = vsub.f32 1.0, %v117
    %v121 = vsub.f32 1.0, %v119
    %v122 = vmul.f32 %v96, %v120
    %v123 = vmul.f32 %v97, %v121
    %v124 = vadd.f32 %v58, %v122
    %v125 = vadd.f32 %v59, %v123
    %126 = vst [vmem:[#allocation2] sm:$0xff] %v124
    %127 = vst [vmem:[#allocation2 + $0x8] sm:$0xff] %v125
    // Predicated region
    $region22: #{tpu_custom_call.1} parent=1 // pred_check
      %p128 = pneg %p52
    $region23: #{tpu_custom_call.1} parent=1 // pred_check_branch
      %130 = sbr.rel (%p128) target = $region25
    $region24: #{tpu_custom_call.1} parent=1 // pred_region
      %v131 = vld [vmem:[#allocation2] sm:$0xff]
      %v132 = vld [vmem:[#allocation2 + $0x8] sm:$0xff]
      %v133 = vadd.f32 %v131, %v132
      %134 = vadd.xlane.f32.xlu0 %v133
      %v135 = vpop.xlane.xlu0 %134
      %v136 = vrot.slane %v135, 4
      %v137 = vadd.f32 %v135, %v136
      %v138 = vrot.slane %v137, 2
      %v139 = vadd.f32 %v137, %v138
      %v140 = vrot.slane %v139, 1
      %v141 = vadd.f32 %v139, %v140
      %s142 = vtos %v141
      %v143 = vstv %s142
      %144 = vst [vmem:[#allocation8] sm:$0xff] %v143
    $region25: #{tpu_custom_call.1} parent=1 // pred_fallthru
      _
    // Predicated region
    $region26: #{tpu_custom_call.1} parent=1 // pred_check
      _
    $region27: #{tpu_custom_call.1} parent=1 // pred_check_branch
      %146 = sbr.rel (0) target = $region29
    $region28: #{tpu_custom_call.1} parent=1 // pred_region
      %s148 = ssub.s32 128, 128
      %149 = vsyncadd [#allocation5], %s148
      %s151 = sshll.u32 [#allocation8], 4
      %s152 = int_to_ptr.vmem [resolvable:$true] %s151
      %154 = dma.vmem_to_hbm [thread:$0]  %s152, 128, %s2, [#allocation5]
    $region29: #{tpu_custom_call.1} parent=1 // pred_fallthru
      _
    // Predicated region
    $region30: #{tpu_custom_call.1} parent=1 // pred_check
      _
    $region31: #{tpu_custom_call.1} parent=1 // pred_check_branch
      %156 = sbr.rel (0) target = $region33
    $region32: #{tpu_custom_call.1} parent=1 // pred_region
      %157 = dma.done [#allocation5], 128
    $region33: #{tpu_custom_call.1} parent=1 // pred_fallthru
      _
    %158 = vsyncpa [#allocation4], 1
    %159 = vsyncpa [#allocation7], 1
    %160 = vsyncpa [#allocation5], 1

</llo_original>
